<compile_context>
chip_gen: v7x
topology: tpu7x:2x2x1
jax: 0.10.0
libtpu: 0.0.40
codegen_flags: <defaults>
</compile_context>

<pallas_src>
import jax
import jax.numpy as jnp
from jax.experimental import pallas as pl
from jax.experimental.pallas import tpu as pltpu


def mlp_kernel(x_ref, w1_ref, b1_ref, w2_ref, b2_ref, o_ref):
    # x: [B, I] bf16, w1: [I, H] bf16 (pre-transposed), b1: [1, H] f32,
    # w2: [H, C] bf16 (pre-transposed), b2: [1, C] f32, o: [B, C] f32.
    h = jnp.dot(x_ref[...], w1_ref[...], preferred_element_type=jnp.float32)
    h = jnp.maximum(h + b1_ref[...], 0.0)            # bias + ReLU in f32 (v5e-safe)
    out = jnp.dot(h.astype(jnp.bfloat16), w2_ref[...],
                  preferred_element_type=jnp.float32)
    o_ref[...] = out + b2_ref[...]                   # f32 epilogue, f32 store


def prepare_params(w1, b1, w2, b2):
    """One-time weight preprocessing (hoisted out of the per-call hot path).

    PyTorch stores W as [out_features, in_features]; pre-transpose to
    [in, out] so the MXU is fed directly (no in-kernel XLU transpose) and
    cast the matmul operands to bf16.  Biases stay f32.
    """
    w1t = jnp.asarray(w1).T.astype(jnp.bfloat16)          # [I, H]
    w2t = jnp.asarray(w2).T.astype(jnp.bfloat16)          # [H, C]
    b1r = jnp.asarray(b1, jnp.float32).reshape(1, -1)     # [1, H]
    b2r = jnp.asarray(b2, jnp.float32).reshape(1, -1)     # [1, C]
    return w1t, b1r, w2t, b2r


@jax.jit
def neural_net_forward(x, w1t, b1r, w2t, b2r):
    """Fused Linear -> ReLU -> Linear (y = x @ W.T + b, PyTorch convention)."""
    B = x.shape[0]
    C = w2t.shape[1]
    vmem = pltpu.MemorySpace.VMEM
    out = pl.pallas_call(
        mlp_kernel,
        out_shape=jax.ShapeDtypeStruct((B, C), jnp.float32),
        # Single-block case: no grid; every operand is a whole-array VMEM block
        # (~3 KB total -- trivially within VMEM on v5e/v6e/v7x).
        in_specs=[
            pl.BlockSpec(memory_space=vmem),
            pl.BlockSpec(memory_space=vmem),
            pl.BlockSpec(memory_space=vmem),
            pl.BlockSpec(memory_space=vmem),
            pl.BlockSpec(memory_space=vmem),
        ],
        out_specs=pl.BlockSpec(memory_space=vmem),
    )(x.astype(jnp.bfloat16), w1t, b1r, w2t, b2r)
    # TODO(synk): if batch/hidden grow large, add a batch-tiled grid marked
    # "parallel" (shards across v7x's 2 TensorCores) with weights resident via
    # index_map -> (0, 0); re-derive the tile budget against v7x's 64 MiB VMEM
    # and use 256-wide N tiles on v6e/v7x once H/C >= 256.  Unnecessary at B=8.
    return out


if __name__ == "__main__":
    # Shapes consistent with NeuralNet(input_size, hidden_size, num_classes)
    batch = 8
    input_size = 32
    hidden_size = 32
    num_classes = 16

    key = jax.random.PRNGKey(0)
    kx, kw1, kb1, kw2, kb2 = jax.random.split(key, 5)

    x = jax.random.normal(kx, (batch, input_size), dtype=jnp.float32)
    # PyTorch-shape convention: W is [out_features, in_features]
    w1 = jax.random.normal(kw1, (hidden_size, input_size), dtype=jnp.float32) * 0.1
    b1 = jax.random.normal(kb1, (hidden_size,), dtype=jnp.float32) * 0.1
    w2 = jax.random.normal(kw2, (num_classes, hidden_size), dtype=jnp.float32) * 0.1
    b2 = jax.random.normal(kb2, (num_classes,), dtype=jnp.float32) * 0.1

    # Hoisted once (module-init equivalent); not part of the per-call path.
    params = prepare_params(w1, b1, w2, b2)

    out = neural_net_forward(x, *params)
    out = jax.block_until_ready(out)

    # Reference mirrors the kernel's numerics: bf16-rounded matmul operands,
    # f32 accumulation, bias/ReLU in f32.
    xb = x.astype(jnp.bfloat16).astype(jnp.float32)
    w1b = w1.astype(jnp.bfloat16).astype(jnp.float32)
    w2b = w2.astype(jnp.bfloat16).astype(jnp.float32)
    h = jnp.maximum(xb @ w1b.T + b1, 0.0)
    hb = h.astype(jnp.bfloat16).astype(jnp.float32)
    ref = hb @ w2b.T + b2

    assert out.shape == (batch, num_classes)
    assert jnp.allclose(out, ref, atol=2e-3, rtol=2e-3)

    print("KERNEL_OK")
</pallas_src>

<mosaic_0001>
module attributes {stable_mosaic.version = 11 : i64} {
  func.func @mlp_kernel(%arg0: memref<8x32xbf16, #tpu.memory_space<vmem>>, %arg1: memref<32x32xbf16, #tpu.memory_space<vmem>>, %arg2: memref<1x32xf32, #tpu.memory_space<vmem>>, %arg3: memref<32x16xbf16, #tpu.memory_space<vmem>>, %arg4: memref<1x16xf32, #tpu.memory_space<vmem>>, %arg5: memref<8x16xf32, #tpu.memory_space<vmem>>) attributes {dimension_semantics = [], scalar_prefetch = 0 : i64, scratch_operands = 0 : i64, tpu.core_type = #tpu.core_type<tc>} {
    %c0 = arith.constant 0 : index
    %c0_0 = arith.constant 0 : index
    %0 = vector.load %arg0[%c0, %c0_0] : memref<8x32xbf16, #tpu.memory_space<vmem>>, vector<8x32xbf16>
    %c0_1 = arith.constant 0 : index
    %c0_2 = arith.constant 0 : index
    %1 = vector.load %arg1[%c0_1, %c0_2] : memref<32x32xbf16, #tpu.memory_space<vmem>>, vector<32x32xbf16>
    %cst = arith.constant dense<0.000000e+00> : vector<8x32xf32>
    %2 = tpu.matmul %0, %1, %cst {dimension_numbers = #tpu.dot_dimension_numbers<[1], [0], [0], [1], [0, 0, 1, 1], [], []>} : vector<8x32xbf16>, vector<32x32xbf16>, vector<8x32xf32> -> vector<8x32xf32>
    %c0_3 = arith.constant 0 : index
    %c0_4 = arith.constant 0 : index
    %3 = vector.load %arg2[%c0_3, %c0_4] : memref<1x32xf32, #tpu.memory_space<vmem>>, vector<1x32xf32>
    %4 = vector.broadcast %3 : vector<1x32xf32> to vector<8x32xf32>
    %5 = arith.addf %2, %4 : vector<8x32xf32>
    %cst_5 = arith.constant 0.000000e+00 : f32
    %6 = vector.broadcast %cst_5 : f32 to vector<8x32xf32>
    %7 = arith.maximumf %5, %6 : vector<8x32xf32>
    %8 = arith.truncf %7 : vector<8x32xf32> to vector<8x32xbf16>
    %c0_6 = arith.constant 0 : index
    %c0_7 = arith.constant 0 : index
    %9 = vector.load %arg3[%c0_6, %c0_7] : memref<32x16xbf16, #tpu.memory_space<vmem>>, vector<32x16xbf16>
    %cst_8 = arith.constant dense<0.000000e+00> : vector<8x16xf32>
    %10 = tpu.matmul %8, %9, %cst_8 {dimension_numbers = #tpu.dot_dimension_numbers<[1], [0], [0], [1], [0, 0, 1, 1], [], []>} : vector<8x32xbf16>, vector<32x16xbf16>, vector<8x16xf32> -> vector<8x16xf32>
    %c0_9 = arith.constant 0 : index
    %c0_10 = arith.constant 0 : index
    %11 = vector.load %arg4[%c0_9, %c0_10] : memref<1x16xf32, #tpu.memory_space<vmem>>, vector<1x16xf32>
    %12 = vector.broadcast %11 : vector<1x16xf32> to vector<8x16xf32>
    %13 = arith.addf %10, %12 : vector<8x16xf32>
    %c0_11 = arith.constant 0 : index
    %c0_12 = arith.constant 0 : index
    %14 = vector.load %arg5[%c0_11, %c0_12] : memref<8x16xf32, #tpu.memory_space<vmem>>, vector<8x16xf32>
    tpu.vector_store %arg5[%c0_11, %c0_12], %13 {strides = array<i32>} : memref<8x16xf32, #tpu.memory_space<vmem>>, vector<8x16xf32>,
    return
  }
}

</mosaic_0001>

<llo_original>
// kernel: neural_net_forward.1
$region0: #{neural_net_forward.1}
  #allocation0 [shape = 'u32[]', space=smem, size = 0x4, offset = 0x4, fixed_abs, tag = 'smem constant byte address 0x4 - core index']
  #allocation1 [shape = 'u32[144,128]{1,0:T(1,128)}', space=vmem, size = 0x12000, scoped, tag = 'internal scratch']
  %s0 = inlined_call_operand.vmem [shape: bf16[8,32], index: 0, kind: input, shape index: {}]
  %s1 = inlined_call_operand.vmem [shape: bf16[32,32], index: 1, kind: input, shape index: {}]
  %s2 = inlined_call_operand.vmem [shape: f32[1,32], index: 2, kind: input, shape index: {}]
  %s3 = inlined_call_operand.vmem [shape: bf16[32,16], index: 3, kind: input, shape index: {}]
  %s4 = inlined_call_operand.vmem [shape: f32[1,16], index: 4, kind: input, shape index: {}]
  %s5 = inlined_call_operand.hbm [shape: f32[8,16], index: 5, kind: output, shape index: {}]
  %s6 = sld [smem:[#allocation0]]
  $region30: #{neural_net_forward.1} parent=0
    _
  %s8 = ssub.s32 1, %s6
  %s9 = scalar_select 0, %s8, %s6
  $region1: #{neural_net_forward.1} parent=0
    #allocation2 [shape = 'u8[4096]{0}', space=vmem, size = 0x1000, scoped, tag = 'output window, operand 0, single buffered']
    #allocation3 [shape = 's32[1]{0}', space=sflag, size = 0x4, scoped, tag = 'scoped memory for neural_net_forward.1']
    %10 = vsyncpa [#allocation3], 0
    // Predicated region
    $region2: #{neural_net_forward.1} parent=1 // pred_check
      _
    $region3: #{neural_net_forward.1} parent=1 // pred_check_branch
      %12 = sbr.rel (0) target = $region5
    $region4: #{neural_net_forward.1} parent=1 // pred_region
      _
    $region5: #{neural_net_forward.1} parent=1 // pred_fallthru
      _
    // Predicated region
    $region6: #{neural_net_forward.1} parent=1 // pred_check
      _
    $region7: #{neural_net_forward.1} parent=1 // pred_check_branch
      %14 = sbr.rel (0) target = $region9
    $region8: #{neural_net_forward.1} parent=1 // pred_region
      _
    $region9: #{neural_net_forward.1} parent=1 // pred_fallthru
      _
    // Predicated region
    $region10: #{neural_net_forward.1} parent=1 // pred_check
      _
    $region11: #{neural_net_forward.1} parent=1 // pred_check_branch
      %16 = sbr.rel (0) target = $region13
    $region12: #{neural_net_forward.1} parent=1 // pred_region
      _
    $region13: #{neural_net_forward.1} parent=1 // pred_fallthru
      _
    // Predicated region
    $region14: #{neural_net_forward.1} parent=1 // pred_check
      _
    $region15: #{neural_net_forward.1} parent=1 // pred_check_branch
      %18 = sbr.rel (0) target = $region17
    $region16: #{neural_net_forward.1} parent=1 // pred_region
      _
    $region17: #{neural_net_forward.1} parent=1 // pred_fallthru
      _
    // Predicated region
    $region18: #{neural_net_forward.1} parent=1 // pred_check
      _
    $region19: #{neural_net_forward.1} parent=1 // pred_check_branch
      %20 = sbr.rel (0) target = $region21
    $region20: #{neural_net_forward.1} parent=1 // pred_region
      _
    $region21: #{neural_net_forward.1} parent=1 // pred_fallthru
      _
    %v22 = vld [vmem:[%s0] sm:$0xf]
    %v23 = vld [vmem:[%s1] sm:$0xf]
    %v24 = vld [vmem:[%s1 + $0x4] sm:$0xf]
    %v25 = vld [vmem:[%s1 + $0x8] sm:$0xf]
    %v26 = vld [vmem:[%s1 + $0xc] sm:$0xf]
    %v27 = vld [vmem:[%s2] sm:$0x1]
    %v29 = vlaneseq
    %v30 = vshrl.u32 %v29, 7
    %v31 = vsub.s32 0, %v30
    %v32 = vrot.slane %v27, %v31
    %v38 = vunpack.c.l.b16 %v23
    %v39 = vunpack.c.l.b16 %v24
    %v40 = vunpack.c.l.b16 %v25
    %v41 = vunpack.c.l.b16 %v26
    %v42 = vpack.c.b16 %v39, %v38
    %v43 = vpack.c.b16 %v41, %v40
    %vm46 = vcmask 261120
    %v48 = vsel %vm46, %v22, 0
    %50 = vmatprep.subr.bf16.mxu0 0
    %51 = vmatpush1.bf16.msra.mxu0 %v42
    %52 = vmatprep.subr.bf16.mxu0 0
    %53 = vmatpush1.bf16.msra.mxu0 %v43
    %54 = vmatprep.subr.bf16.mxu0 0
    %55 = vmatpush1.bf16.msra.mxu0 0
    %56 = vmatprep.subr.bf16.mxu0 0
    %57 = vmatpush1.bf16.msra.mxu0 0
    %58 = vmatprep.subr.bf16.mxu0 0
    %59 = vmatpush1.bf16.msra.mxu0 0
    %60 = vmatprep.subr.bf16.mxu0 0
    %61 = vmatpush1.bf16.msra.mxu0 0
    %62 = vmatprep.subr.bf16.mxu0 0
    %63 = vmatpush1.bf16.msra.mxu0 0
    %64 = vmatprep.subr.bf16.mxu0 0
    %65 = vmatpush1.bf16.msra.mxu0 0
    %66 = vmatprep.subr.bf16.mxu0 0
    %67 = vmatpush1.bf16.msra.mxu0 0
    %68 = vmatprep.subr.bf16.mxu0 0
    %69 = vmatpush1.bf16.msra.mxu0 0
    %70 = vmatprep.subr.bf16.mxu0 0
    %71 = vmatpush1.bf16.msra.mxu0 0
    %72 = vmatprep.subr.bf16.mxu0 0
    %73 = vmatpush1.bf16.msra.mxu0 0
    %74 = vmatprep.subr.bf16.mxu0 0
    %75 = vmatpush1.bf16.msra.mxu0 0
    %76 = vmatprep.subr.bf16.mxu0 0
    %77 = vmatpush1.bf16.msra.mxu0 0
    %78 = vmatprep.subr.bf16.mxu0 0
    %79 = vmatpush1.bf16.msra.mxu0 0
    %80 = vmatprep.subr.bf16.mxu0 0
    %81 = vmatpush1.bf16.msra.mxu0 0
    %82 = vmatprep.mubr.bf16.mxu0 0
    %83 = vmatmul.mubr.bf16.gmra.mrb[0].mxu0 %v48
    %v84 = vpop.f32.mrb[0].mxu0
    %v85 = vadd.f32 %v32, %v84
    %v86 = vpop.f32.mrb[0].mxu0
    %v87 = vpop.f32.mrb[0].mxu0
    %v88 = vpop.f32.mrb[0].mxu0
    %89 = vdwg.mxu0
    %v90 = vmax.f32 %v85, 0.0
    %v91 = vpack.c.bf16 %v90, %v90
    %v92 = vld [vmem:[%s3] sm:$0xf]
    %v93 = vld [vmem:[%s3 + $0x4] sm:$0xf]
    %v94 = vld [vmem:[%s3 + $0x8] sm:$0xf]
    %v95 = vld [vmem:[%s3 + $0xc] sm:$0xf]
    %v96 = vld [vmem:[%s4] sm:$0x1]
    %v98 = vlaneseq
    %v99 = vshrl.u32 %v98, 7
    %v100 = vsub.s32 0, %v99
    %v101 = vrot.slane %v96, %v100
    %v107 = vunpack.c.l.b16 %v92
    %v108 = vunpack.c.l.b16 %v93
    %v109 = vunpack.c.l.b16 %v94
    %v110 = vunpack.c.l.b16 %v95
    %v111 = vpack.c.b16 %v108, %v107
    %v112 = vpack.c.b16 %v110, %v109
    %v116 = vsel %vm46, %v91, 0
    %118 = vmatprep.subr.bf16.mxu0 0
    %119 = vmatpush1.bf16.msra.mxu0 %v111
    %120 = vmatprep.subr.bf16.mxu0 0
    %121 = vmatpush1.bf16.msra.mxu0 %v112
    %122 = vmatprep.subr.bf16.mxu0 0
    %123 = vmatpush1.bf16.msra.mxu0 0
    %124 = vmatprep.subr.bf16.mxu0 0
    %125 = vmatpush1.bf16.msra.mxu0 0
    %126 = vmatprep.subr.bf16.mxu0 0
    %127 = vmatpush1.bf16.msra.mxu0 0
    %128 = vmatprep.subr.bf16.mxu0 0
    %129 = vmatpush1.bf16.msra.mxu0 0
    %130 = vmatprep.subr.bf16.mxu0 0
    %131 = vmatpush1.bf16.msra.mxu0 0
    %132 = vmatprep.subr.bf16.mxu0 0
    %133 = vmatpush1.bf16.msra.mxu0 0
    %134 = vmatprep.subr.bf16.mxu0 0
    %135 = vmatpush1.bf16.msra.mxu0 0
    %136 = vmatprep.subr.bf16.mxu0 0
    %137 = vmatpush1.bf16.msra.mxu0 0
    %138 = vmatprep.subr.bf16.mxu0 0
    %139 = vmatpush1.bf16.msra.mxu0 0
    %140 = vmatprep.subr.bf16.mxu0 0
    %141 = vmatpush1.bf16.msra.mxu0 0
    %142 = vmatprep.subr.bf16.mxu0 0
    %143 = vmatpush1.bf16.msra.mxu0 0
    %144 = vmatprep.subr.bf16.mxu0 0
    %145 = vmatpush1.bf16.msra.mxu0 0
    %146 = vmatprep.subr.bf16.mxu0 0
    %147 = vmatpush1.bf16.msra.mxu0 0
    %148 = vmatprep.subr.bf16.mxu0 0
    %149 = vmatpush1.bf16.msra.mxu0 0
    %150 = vmatprep.mubr.bf16.mxu0 0
    %151 = vmatmul.mubr.bf16.gmra.mrb[0].mxu0 %v116
    %v152 = vpop.f32.mrb[0].mxu0
    %v153 = vadd.f32 %v101, %v152
    %v154 = vpop.f32.mrb[0].mxu0
    %v155 = vpop.f32.mrb[0].mxu0
    %v156 = vpop.f32.mrb[0].mxu0
    %157 = vdwg.mxu0
    %vm158 = vcmask 130048
    %159 = vst.msk [vmem:[#allocation2] sm:$0xff] %vm158, %v153
    // Predicated region
    $region22: #{neural_net_forward.1} parent=1 // pred_check
      _
    $region23: #{neural_net_forward.1} parent=1 // pred_check_branch
      %161 = sbr.rel (0) target = $region25
    $region24: #{neural_net_forward.1} parent=1 // pred_region
      %s163 = ssub.s32 128, 128
      %164 = vsyncadd [#allocation3], %s163
      %s166 = sshll.u32 [#allocation2], 4
      %s167 = int_to_ptr.vmem [resolvable:$true] %s166
      %169 = dma.vmem_to_hbm [thread:$0]  %s167, 128, %s5, [#allocation3]
    $region25: #{neural_net_forward.1} parent=1 // pred_fallthru
      _
    // Predicated region
    $region26: #{neural_net_forward.1} parent=1 // pred_check
      _
    $region27: #{neural_net_forward.1} parent=1 // pred_check_branch
      %171 = sbr.rel (0) target = $region29
    $region28: #{neural_net_forward.1} parent=1 // pred_region
      %172 = dma.done [#allocation3], 128
    $region29: #{neural_net_forward.1} parent=1 // pred_fallthru
      _
    %173 = vsyncpa [#allocation3], 1

</llo_original>
